<compile_context>
chip_gen: v7x
topology: tpu7x:2x2x1
jax: 0.10.0
libtpu: 0.0.40
codegen_flags: <defaults>
</compile_context>

<pallas_src>
import jax
import jax.numpy as jnp
from jax.experimental import pallas as pl
from jax.experimental.pallas import tpu as pltpu


def graphnorm_kernel(x_ref, p_ref, o_ref):
    # x_ref: (1, N, tD) tile (one batch element, one D-column slab)
    # p_ref: (3, tD) packed params: row 0 = weight, 1 = bias, 2 = mean_scale
    x = x_ref[...].astype(jnp.float32)                       # (1, N, tD)
    p = p_ref[...].astype(jnp.float32)                       # (3, tD)
    w = p[0][None, None, :]                                  # (1, 1, tD)
    b = p[1][None, None, :]
    ms = p[2][None, None, :]

    mean = jnp.mean(x, axis=1, keepdims=True)                # (1, 1, tD)
    sub = x - mean * ms                                      # (1, N, tD)
    # std = sqrt(sum(sub^2));  out = w * sub / std + b  -> use rsqrt * mul
    inv_std = jax.lax.rsqrt(jnp.sum(sub * sub, axis=1, keepdims=True))
    o_ref[...] = (w * (sub * inv_std) + b).astype(o_ref.dtype)


def _choose_dim_tile(N, D, budget_bytes=12 * 1024 * 1024):
    """Pick a D-tile: multiple of 128 (or full D) with in+out double-buffered
    blocks (~16*N*tD f32 bytes) under `budget_bytes`."""
    if D % 128 != 0:
        # (8,128) rule: a partial last dim must equal the full array dim.
        return D
    bytes_per_col = 16 * N  # (in + out) * 2 buffers * 4 bytes
    max_td = max(128, (budget_bytes // bytes_per_col) // 128 * 128)
    td = min(D, max_td)
    while D % td != 0:      # keep it a divisor of D (td is a multiple of 128)
        td -= 128
    return td


def graph_norm(x, weight, bias, mean_scale):
    """x: (B, N, D) float32; weight/bias/mean_scale: (D,)."""
    B, N, D = x.shape
    params = jnp.stack(
        [weight.astype(x.dtype), bias.astype(x.dtype), mean_scale.astype(x.dtype)],
        axis=0,
    )  # (3, D) — single small DMA per grid step instead of three

    tD = _choose_dim_tile(N, D)
    grid = (B, D // tD)

    return pl.pallas_call(
        graphnorm_kernel,
        out_shape=jax.ShapeDtypeStruct((B, N, D), x.dtype),
        grid_spec=pltpu.PrefetchScalarGridSpec(
            num_scalar_prefetch=0,
            grid=grid,
            in_specs=[
                pl.BlockSpec((1, N, tD), lambda b, d: (b, 0, d)),
                pl.BlockSpec((3, tD), lambda b, d: (0, d)),
            ],
            out_specs=pl.BlockSpec((1, N, tD), lambda b, d: (b, 0, d)),
        ),
        compiler_params=pltpu.CompilerParams(
            dimension_semantics=("parallel", "parallel"),
            vmem_limit_bytes=32 * 1024 * 1024,
        ),
    )(x, params)


def graph_norm_ref(x, weight, bias, mean_scale):
    """Pure-JAX reference mirroring the PyTorch forward exactly."""
    mean = jnp.mean(x, axis=1, keepdims=True)
    sub = x - mean * mean_scale
    std = jnp.sqrt(jnp.sum(sub ** 2, axis=1, keepdims=True))
    return weight * (sub / std) + bias


if __name__ == "__main__":
    key = jax.random.PRNGKey(0)
    B, N, D = 2, 8, 32  # batch_size x num_nodes x dim_node (hidden_dim=32)

    x = jax.random.normal(key, (B, N, D), dtype=jnp.float32)

    # Deterministic parameter init matching nn.Parameter defaults in __init__:
    weight = jnp.ones((D,), dtype=jnp.float32)
    bias = jnp.zeros((D,), dtype=jnp.float32)
    mean_scale = jnp.ones((D,), dtype=jnp.float32)

    out = graph_norm(x, weight, bias, mean_scale)
    out = jax.block_until_ready(out)

    ref = graph_norm_ref(x, weight, bias, mean_scale)
    assert out.shape == (B, N, D)
    assert jnp.allclose(out, ref, atol=1e-5, rtol=1e-5), "mismatch vs reference"

    print("KERNEL_OK")
</pallas_src>

<mosaic_0001>
module attributes {stable_mosaic.version = 11 : i64} {
  func.func @graphnorm_kernel(%arg0: i32, %arg1: i32, %arg2: memref<1x8x32xf32, #tpu.memory_space<vmem>>, %arg3: memref<3x32xf32, #tpu.memory_space<vmem>>, %arg4: memref<1x8x32xf32, #tpu.memory_space<vmem>>) attributes {dimension_semantics = [#tpu.dimension_semantics<parallel>, #tpu.dimension_semantics<parallel>], iteration_bounds = array<i64: 2, 1>, scalar_prefetch = 0 : i64, scratch_operands = 0 : i64, tpu.core_type = #tpu.core_type<tc>, window_params = [{transform_indices = @transform_0, window_bounds = array<i64: 1, 8, 32>}, {transform_indices = @transform_1, window_bounds = array<i64: 3, 32>}, {transform_indices = @transform_2, window_bounds = array<i64: 1, 8, 32>}]} {
    %c0 = arith.constant 0 : index
    %c0_0 = arith.constant 0 : index
    %c0_1 = arith.constant 0 : index
    %0 = vector.load %arg2[%c0, %c0_0, %c0_1] : memref<1x8x32xf32, #tpu.memory_space<vmem>>, vector<1x8x32xf32>
    %c0_2 = arith.constant 0 : index
    %c0_3 = arith.constant 0 : index
    %1 = vector.load %arg3[%c0_2, %c0_3] : memref<3x32xf32, #tpu.memory_space<vmem>>, vector<3x32xf32>
    %2 = vector.extract_strided_slice %1 {offsets = [0, 0], sizes = [1, 32], strides = [1, 1]} : vector<3x32xf32> to vector<1x32xf32>
    %3 = vector.shape_cast %2 : vector<1x32xf32> to vector<32xf32>
    %4 = vector.shape_cast %3 : vector<32xf32> to vector<1x1x32xf32>
    %5 = vector.extract_strided_slice %1 {offsets = [1, 0], sizes = [1, 32], strides = [1, 1]} : vector<3x32xf32> to vector<1x32xf32>
    %6 = vector.shape_cast %5 : vector<1x32xf32> to vector<32xf32>
    %7 = vector.shape_cast %6 : vector<32xf32> to vector<1x1x32xf32>
    %8 = vector.extract_strided_slice %1 {offsets = [2, 0], sizes = [1, 32], strides = [1, 1]} : vector<3x32xf32> to vector<1x32xf32>
    %9 = vector.shape_cast %8 : vector<1x32xf32> to vector<32xf32>
    %10 = vector.shape_cast %9 : vector<32xf32> to vector<1x1x32xf32>
    %cst = arith.constant dense<0.000000e+00> : vector<1x32xf32>
    %11 = vector.multi_reduction <add>, %0, %cst [1] : vector<1x8x32xf32> to vector<1x32xf32>
    %12 = vector.shape_cast %11 : vector<1x32xf32> to vector<1x1x32xf32>
    %cst_4 = arith.constant 8.000000e+00 : f32
    %13 = vector.broadcast %cst_4 : f32 to vector<1x1x32xf32>
    %14 = arith.divf %12, %13 : vector<1x1x32xf32>
    %15 = arith.mulf %14, %10 : vector<1x1x32xf32>
    %16 = vector.broadcast %15 : vector<1x1x32xf32> to vector<1x8x32xf32>
    %17 = arith.subf %0, %16 : vector<1x8x32xf32>
    %18 = arith.mulf %17, %17 : vector<1x8x32xf32>
    %cst_5 = arith.constant dense<0.000000e+00> : vector<1x32xf32>
    %19 = vector.multi_reduction <add>, %18, %cst_5 [1] : vector<1x8x32xf32> to vector<1x32xf32>
    %20 = vector.shape_cast %19 : vector<1x32xf32> to vector<1x1x32xf32>
    %21 = math.rsqrt %20 : vector<1x1x32xf32>
    %22 = vector.broadcast %21 : vector<1x1x32xf32> to vector<1x8x32xf32>
    %23 = arith.mulf %17, %22 : vector<1x8x32xf32>
    %24 = vector.broadcast %4 : vector<1x1x32xf32> to vector<1x8x32xf32>
    %25 = arith.mulf %24, %23 : vector<1x8x32xf32>
    %26 = vector.broadcast %7 : vector<1x1x32xf32> to vector<1x8x32xf32>
    %27 = arith.addf %25, %26 : vector<1x8x32xf32>
    %c0_6 = arith.constant 0 : index
    %c0_7 = arith.constant 0 : index
    %c0_8 = arith.constant 0 : index
    %28 = vector.load %arg4[%c0_6, %c0_7, %c0_8] : memref<1x8x32xf32, #tpu.memory_space<vmem>>, vector<1x8x32xf32>
    tpu.vector_store %arg4[%c0_6, %c0_7, %c0_8], %27 {strides = array<i32>} : memref<1x8x32xf32, #tpu.memory_space<vmem>>, vector<1x8x32xf32>,
    return
  }
  func.func @transform_0(%arg0: i32, %arg1: i32) -> (i32, i32, i32) {
    %c0_i32 = arith.constant 0 : i32
    %c0_i32_0 = arith.constant 0 : i32
    return %arg0, %c0_i32, %arg1 : i32, i32, i32
  }
  func.func @transform_1(%arg0: i32, %arg1: i32) -> (i32, i32) {
    %c0_i32 = arith.constant 0 : i32
    %c0_i32_0 = arith.constant 0 : i32
    return %c0_i32, %arg1 : i32, i32
  }
  func.func @transform_2(%arg0: i32, %arg1: i32) -> (i32, i32, i32) {
    %c0_i32 = arith.constant 0 : i32
    %c0_i32_0 = arith.constant 0 : i32
    return %arg0, %c0_i32, %arg1 : i32, i32, i32
  }
}

</mosaic_0001>

<llo_original>
// kernel: tpu_custom_call.1
$region0: #{tpu_custom_call.1}
  #allocation0 [shape = 'u32[]', space=smem, size = 0x4, offset = 0x4, fixed_abs, tag = 'smem constant byte address 0x4 - core index']
  #allocation1 [shape = 'u32[144,128]{1,0:T(1,128)}', space=vmem, size = 0x12000, scoped, tag = 'internal scratch']
  %s0 = inlined_call_operand.hbm [shape: f32[2,8,32], index: 0, kind: input, shape index: {}]
  %s1 = inlined_call_operand.hbm [shape: f32[3,32], index: 1, kind: input, shape index: {}]
  %s2 = inlined_call_operand.hbm [shape: f32[2,8,32], index: 2, kind: output, shape index: {}]
  %s3 = sld [smem:[#allocation0]]
  $region49: #{tpu_custom_call.1} parent=0
    _
  %s5 = ssub.s32 1, %s3
  %s6 = scalar_select 0, %s5, %s3
  $region1: #{tpu_custom_call.1} parent=0
    #allocation2 [shape = 'u8[8192]{0}', space=vmem, size = 0x2000, scoped, tag = 'input window, operand 0']
    #allocation3 [shape = 's32[2]{0}', space=sflag, size = 0x8, scoped, tag = 'scoped memory for tpu_custom_call.1']
    #allocation4 [shape = 's32[2]{0}', space=sflag, size = 0x8, scoped, tag = 'scoped memory for tpu_custom_call.1']
    #allocation5 [shape = 'u8[2048]{0}', space=vmem, size = 0x800, scoped, tag = 'input window, operand 1, single buffered']
    #allocation6 [shape = 's32[1]{0}', space=sflag, size = 0x4, scoped, tag = 'scoped memory for tpu_custom_call.1']
    #allocation7 [shape = 'u8[8192]{0}', space=vmem, size = 0x2000, scoped, tag = 'output window, operand 0']
    %7 = vsyncpa [#allocation3], 0
    %s8 = scalar_lea.sflag [#allocation3], 1
    %9 = vsyncpa %s8, 0
    %10 = vsyncpa [#allocation6], 0
    %11 = vsyncpa [#allocation4], 0
    %s12 = scalar_lea.sflag [#allocation4], 1
    %13 = vsyncpa %s12, 0
    loop: start=0, step=1, limit=4
    $region2: #{tpu_custom_call.1} parent=1 // loop_pre_header
      _
    $region3: #{tpu_custom_call.1} parent=1 // loop_header
      %s15 = sphi 0, %s19
      %p16 = scmp.ge.s32.totalorder %s15, 4
      %s22 = sphi 0, %s34
      %s23 = sphi 0, %s30
      %s24 = sphi 0, %s22
      %s25 = sphi 0, %s23
      %s26 = sphi 0, %s24
      %s27 = sphi 0, %s25
      %s39 = sphi 0, %s41
      %s42 = sphi 0, %s39
      %s43 = sphi 0, %s42
      %s59 = sphi 0, %s43
      %s65 = sphi 0, %s67
      %s68 = sphi 0, %s65
      %s69 = sphi 0, %s68
      %s85 = sphi 0, %s69
      %s93 = sphi 0, %s95
      %s96 = sphi 0, %s93
      %s97 = sphi 0, %s96
      %s113 = sphi 0, %s97
    $region4: #{tpu_custom_call.1} parent=1 // loop_header_branch
      %18 = sbr.rel (%p16) target = $region8
    $region5: #{tpu_custom_call.1} parent=1 // loop_body
      %s20 = ssub.s32 %s15, 1
      %s21 = ssub.s32 %s15, 2
      %s28 = sadd.s32 1, %s23
      %p29 = scmp.ge.s32.totalorder %s28, 1
      %s30 = scalar_select %p29, 0, %s28
      %s31 = sadd.s32 1, %s22
      %s32 = scalar_select %p29, %s31, %s22
      %p33 = scmp.ge.s32.totalorder %s32, 2
      %s34 = scalar_select %p33, 0, %s32
      %s35 = ssub.s32 %s22, %s34
      %s36 = ssub.s32 %s23, %s30
      %s37 = sor.u32 %s35, %s36
      %p38 = scmp.eq.s32.totalorder %s37, 0
      %s40 = sadd.s32 %s39, 1
      %s41 = scalar_select %p38, %s39, %s40
      %p44 = pneg %p38
      %p45 = scmp.eq.s32.totalorder %s15, 1
      %p46 = por %p44, %p45
      %p47 = scmp.ne.s32.totalorder %s39, %s42
      %p48 = scmp.eq.s32.totalorder %s15, 0
      %p49 = por %p47, %p48
      %p50 = scmp.ne.s32.totalorder %s39, %s42
      %p51 = scmp.eq.s32.totalorder %s20, 1
      %p52 = por %p50, %p51
      %p53 = scmp.ne.s32.totalorder %s42, %s43
      %p54 = scmp.eq.s32.totalorder %s20, 0
      %p55 = por %p53, %p54
      %p56 = scmp.ne.s32.totalorder %s42, %s43
      %p57 = scmp.eq.s32.totalorder %s21, 1
      %p58 = por %p56, %p57
      %p60 = scmp.ne.s32.totalorder %s43, %s59
      %p61 = scmp.eq.s32.totalorder %s21, 0
      %p62 = por %p60, %p61
      %s63 = ssub.s32 %s23, %s30
      %p64 = scmp.eq.s32.totalorder %s63, 0
      %s66 = sadd.s32 %s65, 1
      %s67 = scalar_select %p64, %s65, %s66
      %p70 = pneg %p64
      %p71 = scmp.eq.s32.totalorder %s15, 1
      %p72 = por %p70, %p71
      %p73 = scmp.ne.s32.totalorder %s65, %s68
      %p74 = scmp.eq.s32.totalorder %s15, 0
      %p75 = por %p73, %p74
      %p76 = scmp.ne.s32.totalorder %s65, %s68
      %p77 = scmp.eq.s32.totalorder %s20, 1
      %p78 = por %p76, %p77
      %p79 = scmp.ne.s32.totalorder %s68, %s69
      %p80 = scmp.eq.s32.totalorder %s20, 0
      %p81 = por %p79, %p80
      %p82 = scmp.ne.s32.totalorder %s68, %s69
      %p83 = scmp.eq.s32.totalorder %s21, 1
      %p84 = por %p82, %p83
      %p86 = scmp.ne.s32.totalorder %s69, %s85
      %p87 = scmp.eq.s32.totalorder %s21, 0
      %p88 = por %p86, %p87
      %s89 = ssub.s32 %s22, %s34
      %s90 = ssub.s32 %s23, %s30
      %s91 = sor.u32 %s89, %s90
      %p92 = scmp.eq.s32.totalorder %s91, 0
      %s94 = sadd.s32 %s93, 1
      %s95 = scalar_select %p92, %s93, %s94
      %p98 = pneg %p92
      %p99 = scmp.eq.s32.totalorder %s15, 1
      %p100 = por %p98, %p99
      %p101 = scmp.ne.s32.totalorder %s93, %s96
      %p102 = scmp.eq.s32.totalorder %s15, 0
      %p103 = por %p101, %p102
      %p104 = scmp.ne.s32.totalorder %s93, %s96
      %p105 = scmp.eq.s32.totalorder %s20, 1
      %p106 = por %p104, %p105
      %p107 = scmp.ne.s32.totalorder %s96, %s97
      %p108 = scmp.eq.s32.totalorder %s20, 0
      %p109 = por %p107, %p108
      %p110 = scmp.ne.s32.totalorder %s96, %s97
      %p111 = scmp.eq.s32.totalorder %s21, 1
      %p112 = por %p110, %p111
      %p114 = scmp.ne.s32.totalorder %s97, %s113
      %p115 = scmp.eq.s32.totalorder %s21, 0
      %p116 = por %p114, %p115
      %p117 = scmp.le.s32.totalorder 1, %s15
      %p118 = scmp.lt.s32.totalorder %s15, 3
      %p119 = pnand %p117, %p118
      %p120 = pneg %p119
      // Predicated region
      $region9: #{tpu_custom_call.1} parent=5 // pred_check
        _
      $region10: #{tpu_custom_call.1} parent=5 // pred_check_branch
        %122 = sbr.rel (%p119) target = $region12
      $region11: #{tpu_custom_call.1} parent=5 // pred_region
        %s123 = ssub.s32 %s15, 1
        // Predicated region
        $region13: #{tpu_custom_call.1} parent=11 // pred_check
          %p124 = pneg %p81
        $region14: #{tpu_custom_call.1} parent=11 // pred_check_branch
          %126 = sbr.rel (%p124) target = $region16
        $region15: #{tpu_custom_call.1} parent=11 // pred_region
          %s128 = ssub.s32 64, 64
          %129 = vsyncadd [#allocation6], %s128
          %s130 = smul.addr %s25, 64
          %s131 = scalar_lea.hbm %s1, %s130
          %s133 = sshll.u32 [#allocation5], 4
          %s134 = int_to_ptr.vmem [resolvable:$true] %s133
          %136 = dma.hbm_to_vmem [thread:$0]  %s131, 64, %s134, [#allocation6]
        $region16: #{tpu_custom_call.1} parent=11 // pred_fallthru
          _
      $region12: #{tpu_custom_call.1} parent=5 // pred_fallthru
        _
      %p137 = scmp.lt.s32.totalorder %s15, 2
      // Predicated region
      $region17: #{tpu_custom_call.1} parent=5 // pred_check
        %p138 = pneg %p137
      $region18: #{tpu_custom_call.1} parent=5 // pred_check_branch
        %140 = sbr.rel (%p138) target = $region20
      $region19: #{tpu_custom_call.1} parent=5 // pred_region
        // Predicated region
        $region21: #{tpu_custom_call.1} parent=19 // pred_check
          %p141 = pneg %p49
        $region22: #{tpu_custom_call.1} parent=19 // pred_check_branch
          %143 = sbr.rel (%p141) target = $region24
        $region23: #{tpu_custom_call.1} parent=19 // pred_region
          %s144 = sand.u32 %s39, 1
          %s145 = scalar_lea.sflag [#allocation3], %s144
          %s146 = sand.u32 %s39, 1
          %s147 = smul.addr %s146, 8
          %s148 = scalar_lea.vmem [#allocation2], %s147
          %s150 = ssub.s32 128, 128
          %151 = vsyncadd %s145, %s150
          %s152 = sadd.s32 %s23, %s22
          %s153 = smul.addr %s152, 128
          %s154 = scalar_lea.hbm %s0, %s153
          %s156 = sshll.u32 %s148, 4
          %s157 = int_to_ptr.vmem [resolvable:$true] %s156
          %159 = dma.hbm_to_vmem [thread:$0]  %s154, 128, %s157, %s145
        $region24: #{tpu_custom_call.1} parent=19 // pred_fallthru
          _
      $region20: #{tpu_custom_call.1} parent=5 // pred_fallthru
        _
      %p160 = scmp.le.s32.totalorder 1, %s15
      %p161 = scmp.lt.s32.totalorder %s15, 3
      %p162 = pnand %p160, %p161
      %p163 = pneg %p162
      // Predicated region
      $region25: #{tpu_custom_call.1} parent=5 // pred_check
        _
      $region26: #{tpu_custom_call.1} parent=5 // pred_check_branch
        %165 = sbr.rel (%p162) target = $region28
      $region27: #{tpu_custom_call.1} parent=5 // pred_region
        %s166 = ssub.s32 %s15, 1
        %s167 = sand.u32 %s42, 1
        %s168 = scalar_lea.sflag [#allocation3], %s167
        %s169 = sand.u32 %s42, 1
        %s170 = smul.addr %s169, 8
        %s171 = scalar_lea.vmem [#allocation2], %s170
        // Predicated region
        $region29: #{tpu_custom_call.1} parent=27 // pred_check
          %p172 = pneg %p55
        $region30: #{tpu_custom_call.1} parent=27 // pred_check_branch
          %174 = sbr.rel (%p172) target = $region32
        $region31: #{tpu_custom_call.1} parent=27 // pred_region
          %175 = dma.done %s168, 128
        $region32: #{tpu_custom_call.1} parent=27 // pred_fallthru
          _
        // Predicated region
        $region33: #{tpu_custom_call.1} parent=27 // pred_check
          %p176 = pneg %p81
        $region34: #{tpu_custom_call.1} parent=27 // pred_check_branch
          %178 = sbr.rel (%p176) target = $region36
        $region35: #{tpu_custom_call.1} parent=27 // pred_region
          %179 = dma.done [#allocation6], 64
        $region36: #{tpu_custom_call.1} parent=27 // pred_fallthru
          _
        %s180 = sand.u32 %s42, 1
        %s181 = scalar_lea.sflag [#allocation3], %s180
        %s182 = sand.u32 %s42, 1
        %s183 = smul.addr %s182, 8
        %s184 = scalar_lea.vmem [#allocation2], %s183
        %p185 = pneg %p55
        %p186 = pneg %p52
        %p187 = pneg %p81
        %p188 = pneg %p78
        %p189 = pneg %p109
        %p190 = pneg %p106
        %s191 = sand.u32 %s96, 1
        %s192 = scalar_lea.sflag [#allocation4], %s191
        %s193 = sand.u32 %s96, 1
        %s194 = smul.addr %s193, 8
        %s195 = scalar_lea.vmem [#allocation7], %s194
        %v196 = vld [vmem:[%s171] sm:$0xff]
        %v197 = vld [vmem:[#allocation5] sm:$0x7]
        %vm198 = vcmask 261120
        %v199 = vsel %vm198, %v196, 0.0
        %v200 = vrot.slane %v199, 4
        %v201 = vadd.f32 %v199, %v200
        %v202 = vrot.slane %v201, 2
        %v203 = vadd.f32 %v201, %v202
        %v204 = vrot.slane %v203, 1
        %v205 = vadd.f32 %v203, %v204
        %v206 = vrcp.pop 8.0
        %v207 = vmul.f32 %v205, %v206
        %v208 = vmul.f32 %v207, %v197
        %v209 = vlaneseq
        %v210 = vshrl.u32 %v209, 7
        %v211 = vsub.s32 2, %v210
        %v212 = vrot.slane %v208, %v211
        %v213 = vsub.f32 %v196, %v212
        %v214 = vmul.f32 %v213, %v213
        %v215 = vsel %vm198, %v214, 0.0
        %v216 = vrot.slane %v215, 4
        %v217 = vadd.f32 %v215, %v216
        %v218 = vrot.slane %v217, 2
        %v219 = vadd.f32 %v217, %v218
        %v220 = vrot.slane %v219, 1
        %v221 = vadd.f32 %v219, %v220
        %v222 = vrsqrt.pop %v221
        %v223 = vmul.f32 %v213, %v222
        %v224 = vlaneseq
        %v225 = vshrl.u32 %v224, 7
        %v226 = vsub.s32 0, %v225
        %v227 = vrot.slane %v197, %v226
        %v228 = vmul.f32 %v227, %v223
        %v229 = vlaneseq
        %v230 = vshrl.u32 %v229, 7
        %v231 = vsub.s32 1, %v230
        %v232 = vrot.slane %v197, %v231
        %v233 = vadd.f32 %v228, %v232
        %234 = vst.msk [vmem:[%s195] sm:$0xff] %vm198, %v233
        %s235 = sand.u32 %s96, 1
        %s236 = scalar_lea.sflag [#allocation4], %s235
        %s237 = sand.u32 %s96, 1
        %s238 = smul.addr %s237, 8
        %s239 = scalar_lea.vmem [#allocation7], %s238
        // Predicated region
        $region37: #{tpu_custom_call.1} parent=27 // pred_check
          %p240 = pneg %p106
        $region38: #{tpu_custom_call.1} parent=27 // pred_check_branch
          %242 = sbr.rel (%p240) target = $region40
        $region39: #{tpu_custom_call.1} parent=27 // pred_region
          %s244 = ssub.s32 128, 128
          %245 = vsyncadd %s236, %s244
          %s246 = sadd.s32 %s25, %s24
          %s247 = smul.addr %s246, 128
          %s248 = scalar_lea.hbm %s2, %s247
          %s250 = sshll.u32 %s239, 4
          %s251 = int_to_ptr.vmem [resolvable:$true] %s250
          %253 = dma.vmem_to_hbm [thread:$0]  %s251, 128, %s248, %s236
        $region40: #{tpu_custom_call.1} parent=27 // pred_fallthru
          _
      $region28: #{tpu_custom_call.1} parent=5 // pred_fallthru
        _
      %p254 = scmp.le.s32.totalorder 2, %s15
      // Predicated region
      $region41: #{tpu_custom_call.1} parent=5 // pred_check
        %p255 = pneg %p254
      $region42: #{tpu_custom_call.1} parent=5 // pred_check_branch
        %257 = sbr.rel (%p255) target = $region44
      $region43: #{tpu_custom_call.1} parent=5 // pred_region
        %s258 = ssub.s32 %s15, 2
        // Predicated region
        $region45: #{tpu_custom_call.1} parent=43 // pred_check
          %p259 = pneg %p112
        $region46: #{tpu_custom_call.1} parent=43 // pred_check_branch
          %261 = sbr.rel (%p259) target = $region48
        $region47: #{tpu_custom_call.1} parent=43 // pred_region
          %s262 = sand.u32 %s97, 1
          %s263 = scalar_lea.sflag [#allocation4], %s262
          %s264 = sand.u32 %s97, 1
          %s265 = smul.addr %s264, 8
          %s266 = scalar_lea.vmem [#allocation7], %s265
          %267 = dma.done %s263, 128
        $region48: #{tpu_custom_call.1} parent=43 // pred_fallthru
          _
      $region44: #{tpu_custom_call.1} parent=5 // pred_fallthru
        _
    $region6: #{tpu_custom_call.1} parent=1 // loop_footer
      %s19 = sadd.s32 1, %s15
    $region7: #{tpu_custom_call.1} parent=1 // loop_footer_branch
      %14 = sbr.rel target = $region3
    $region8: #{tpu_custom_call.1} parent=1 // loop_exit
      _
    %268 = vsyncpa [#allocation3], 1
    %s269 = scalar_lea.sflag [#allocation3], 1
    %270 = vsyncpa %s269, 1
    %271 = vsyncpa [#allocation6], 1
    %272 = vsyncpa [#allocation4], 1
    %s273 = scalar_lea.sflag [#allocation4], 1
    %274 = vsyncpa %s273, 1

</llo_original>
